<compile_context>
chip_gen: v7x
topology: tpu7x:2x2x1
jax: 0.10.0
libtpu: 0.0.40
codegen_flags: <defaults>
</compile_context>

<pallas_src>
import functools

import jax
import jax.numpy as jnp
from jax.experimental import pallas as pl
from jax.experimental.pallas import tpu as pltpu


# ----------------------------------------------------------------------------
# helpers
# ----------------------------------------------------------------------------
def _pick_tile(dim, target, multiple=1):
    """Largest power-of-two-ish tile <= target that divides dim and is a
    multiple of `multiple`; falls back to the full dim (always layout-legal)."""
    if dim <= target:
        return dim
    t = target
    while t >= multiple:
        if dim % t == 0 and t % multiple == 0:
            return t
        t //= 2
    return dim


def _pick_head_group(num_heads, head_dim, *, tq=256, tk=256,
                     vmem_budget_bytes=28 * 1024 * 1024):
    """Largest divisor G of num_heads whose per-step working set fits the VMEM
    budget and whose merged output block (G*head_dim lanes) is layout-legal."""
    for g in range(num_heads, 0, -1):
        if num_heads % g != 0:
            continue
        lane_ok = (g == num_heads) or ((g * head_dim) % 128 == 0)
        if not lane_ok:
            continue
        bytes_needed = (
            2 * 2 * g * tq * head_dim          # q block (bf16, double-buffered)
            + 2 * 2 * 2 * g * tk * head_dim    # k, v blocks
            + 2 * 2 * tq * g * head_dim        # output block
            + 4 * g * tq * head_dim            # f32 acc scratch
            + 6 * g * tq * tk                  # f32 scores + bf16 probs temporaries
        )
        if bytes_needed <= vmem_budget_bytes:
            return g
    return num_heads  # full-H output block is always layout-legal


# ----------------------------------------------------------------------------
# Conv1D (GPT-2 "conv1d" == x @ W + b, W: [nx, nf]) — tiled, pipelined matmul
# ----------------------------------------------------------------------------
def _linear_kernel(x_ref, w_ref, b_ref, o_ref, acc_ref):
    @pl.when(pl.program_id(2) == 0)
    def _init():
        acc_ref[...] = jnp.zeros_like(acc_ref)

    acc_ref[...] += jnp.dot(x_ref[...], w_ref[...],
                            preferred_element_type=jnp.float32)

    @pl.when(pl.program_id(2) == pl.num_programs(2) - 1)
    def _finalize():
        o_ref[...] = (acc_ref[...] + b_ref[...].astype(jnp.float32)
                      ).astype(o_ref.dtype)


def conv1d_pallas(x2d, w, b, *, out_dtype=None,
                  tm_target=512, tn_target=512, tk_target=1024):
    M, K = x2d.shape
    N = w.shape[1]
    out_dtype = out_dtype if out_dtype is not None else x2d.dtype
    tm = _pick_tile(M, tm_target, 8)
    tn = _pick_tile(N, tn_target, 128)
    tk = _pick_tile(K, tk_target, 128)   # lane dim of x, sublane dim of w
    return pl.pallas_call(
        _linear_kernel,
        out_shape=jax.ShapeDtypeStruct((M, N), out_dtype),
        grid=(M // tm, N // tn, K // tk),
        in_specs=[
            pl.BlockSpec((tm, tk), lambda i, j, k: (i, k)),
            pl.BlockSpec((tk, tn), lambda i, j, k: (k, j)),
            pl.BlockSpec((1, tn), lambda i, j, k: (0, j)),
        ],
        out_specs=pl.BlockSpec((tm, tn), lambda i, j, k: (i, j)),
        scratch_shapes=[pltpu.VMEM((tm, tn), jnp.float32)],
        compiler_params=pltpu.CompilerParams(
            dimension_semantics=("parallel", "parallel", "arbitrary"),
            vmem_limit_bytes=48 * 1024 * 1024),
    )(x2d, w, b.reshape(1, N))


# ----------------------------------------------------------------------------
# Flash-style causal attention: grid = (B*H/G, q tiles, kv tiles)
# Output is written directly in merged-head (B, S, E) layout (lane-dense).
# ----------------------------------------------------------------------------
def _flash_attn_kernel(q_ref, k_ref, v_ref, o_ref, m_ref, l_ref, acc_ref,
                       *, q_len, kv_len, tq, tk, G):
    qi = pl.program_id(1)
    ki = pl.program_id(2)
    offset = kv_len - q_len  # >= 0 (asserted in the wrapper)

    @pl.when(ki == 0)
    def _init():
        m_ref[...] = jnp.full_like(m_ref, -jnp.inf)
        l_ref[...] = jnp.zeros_like(l_ref)
        acc_ref[...] = jnp.zeros_like(acc_ref)

    q_start = qi * tq
    k_start = ki * tk
    any_visible = k_start <= q_start + (tq - 1) + offset
    fully_visible = (k_start + tk - 1) <= q_start + offset

    def _scores():
        # QK^T with K consumed in its natural layout (no explicit transpose).
        # Q already carries the 1/sqrt(D) (and layer-idx) scale (folded into c_attn).
        return jnp.einsum("gqd,gkd->gqk", q_ref[0], k_ref[0],
                          preferred_element_type=jnp.float32)  # (G, tq, tk)

    def _update(s):
        m_prev = m_ref[...]                                    # (G, tq, 1)
        m_new = jnp.maximum(m_prev, jnp.max(s, axis=-1, keepdims=True))
        alpha = jnp.exp(m_prev - m_new)
        p = jnp.exp(s - m_new)                                 # (G, tq, tk)
        l_ref[...] = alpha * l_ref[...] + jnp.sum(p, axis=-1, keepdims=True)
        acc_ref[...] = alpha * acc_ref[...] + jnp.einsum(
            "gqk,gkd->gqd", p.astype(v_ref.dtype), v_ref[0],
            preferred_element_type=jnp.float32)
        m_ref[...] = m_new

    # Fully visible KV tile: skip all mask math (iota/compare/select).
    @pl.when(fully_visible)
    def _compute_unmasked():
        _update(_scores())

    # Diagonal tile: apply the causal mask. Fully masked tiles run neither branch.
    @pl.when(jnp.logical_and(any_visible, jnp.logical_not(fully_visible)))
    def _compute_masked():
        s = _scores()
        rows = jax.lax.broadcasted_iota(jnp.int32, (tq, tk), 0) + q_start
        cols = jax.lax.broadcasted_iota(jnp.int32, (tq, tk), 1) + k_start
        causal = cols <= rows + offset
        s = jnp.where(causal[None, :, :], s, jnp.finfo(jnp.float32).min)
        _update(s)

    @pl.when(ki == pl.num_programs(2) - 1)
    def _finalize():
        # offset >= 0 guarantees l > 0 for every row (at least column 0 visible).
        inv_l = pl.reciprocal(l_ref[...], approx=True)         # (G, tq, 1)
        merged = jnp.concatenate(
            [acc_ref[g] * inv_l[g] for g in range(G)], axis=-1)  # (tq, G*D)
        o_ref[0] = merged.astype(o_ref.dtype)


def causal_flash_attention_pallas(q, k, v, *, num_heads, out_dtype=None,
                                  tq_target=256, tk_target=256):
    # q: (NG, G, S, D), k/v: (NG, G, T, D); output: (B, S, E) merged-head layout.
    NG, G, S, D = q.shape
    T = k.shape[2]
    assert T >= S, "causal flash kernel assumes kv_len >= q_len (GPT-2 decode/prefill)"
    H = num_heads
    HG = H // G
    B = NG // HG
    E = H * D
    out_dtype = out_dtype if out_dtype is not None else q.dtype
    tq = _pick_tile(S, tq_target, 8)
    tk = _pick_tile(T, tk_target, 8)
    offset = T - S

    def kv_index_map(g, i, j):
        # Clamp to the last causally-visible KV tile for this q tile so that
        # fully-masked (future) tiles re-use the previous block (no fresh DMA).
        last_visible = (i * tq + (tq - 1) + offset) // tk
        return (g, 0, jnp.minimum(j, last_visible), 0)

    kernel = functools.partial(_flash_attn_kernel, q_len=S, kv_len=T,
                               tq=tq, tk=tk, G=G)
    return pl.pallas_call(
        kernel,
        out_shape=jax.ShapeDtypeStruct((B, S, E), out_dtype),
        grid=(NG, S // tq, T // tk),
        in_specs=[
            pl.BlockSpec((1, G, tq, D), lambda g, i, j: (g, 0, i, 0)),
            pl.BlockSpec((1, G, tk, D), kv_index_map),
            pl.BlockSpec((1, G, tk, D), kv_index_map),
        ],
        out_specs=pl.BlockSpec((1, tq, G * D),
                               lambda g, i, j: (g // HG, i, g % HG)),
        scratch_shapes=[
            pltpu.VMEM((G, tq, 1), jnp.float32),   # m (running max)
            pltpu.VMEM((G, tq, 1), jnp.float32),   # l (running denom)
            pltpu.VMEM((G, tq, D), jnp.float32),   # acc
        ],
        compiler_params=pltpu.CompilerParams(
            dimension_semantics=("parallel", "parallel", "arbitrary"),
            vmem_limit_bytes=48 * 1024 * 1024),
    )(q, k, v)


# ----------------------------------------------------------------------------
# Parameter prep: fold the attention scale into the Q third of c_attn, cast bf16.
# ----------------------------------------------------------------------------
def prepare_params(params, config, compute_dtype=jnp.bfloat16):
    E = params["c_attn_w"].shape[0]
    H = config["num_attention_heads"]
    D = E // H
    divisor = 1.0
    if config["scale_attn_weights"]:
        divisor *= float(D) ** 0.5
    if config["scale_attn_by_inverse_layer_idx"]:
        divisor *= float(config["layer_idx"] + 1)
    scale = 1.0 / divisor
    col_scale = jnp.concatenate([jnp.full((E,), scale, jnp.float32),
                                 jnp.ones((2 * E,), jnp.float32)])
    return {
        "c_attn_w": (params["c_attn_w"].astype(jnp.float32)
                     * col_scale[None, :]).astype(compute_dtype),
        "c_attn_b": (params["c_attn_b"].astype(jnp.float32)
                     * col_scale).astype(compute_dtype),
        "c_proj_w": params["c_proj_w"].astype(compute_dtype),
        "c_proj_b": params["c_proj_b"].astype(compute_dtype),
    }


# ----------------------------------------------------------------------------
# Full GPT2Attention forward
# ----------------------------------------------------------------------------
def gpt2_attention_forward(prepared, config, hidden_states, layer_past=None,
                           compute_dtype=jnp.bfloat16):
    B, S, E = hidden_states.shape
    H = config["num_attention_heads"]
    D = E // H
    out_dtype = hidden_states.dtype
    x = hidden_states.astype(compute_dtype)

    # c_attn: [B*S, E] @ [E, 3E] + b  (scale already folded into the Q third)
    qkv = conv1d_pallas(x.reshape(B * S, E),
                        prepared["c_attn_w"], prepared["c_attn_b"],
                        out_dtype=compute_dtype)
    qkv = qkv.reshape(B, S, 3, H, D)

    # split heads: (B, S, H, D) -> (B, H, S, D)
    # TODO(synk): fuse the head-split transposes into the c_attn kernel (emit Q/K/V
    # head-major directly) to save one HBM round trip per tensor.
    query = jnp.transpose(qkv[:, :, 0], (0, 2, 1, 3))
    key = jnp.transpose(qkv[:, :, 1], (0, 2, 1, 3))
    value = jnp.transpose(qkv[:, :, 2], (0, 2, 1, 3))

    if layer_past is not None:
        past_key, past_value = layer_past
        key = jnp.concatenate([past_key.astype(compute_dtype), key], axis=-2)
        value = jnp.concatenate([past_value.astype(compute_dtype), value], axis=-2)
    cache_kv = (key, value)
    # TODO(synk): for decode serving, replace the concat-based cache with a
    # preallocated (B, H, T_max, D) cache updated in place via input_output_aliases.

    T = key.shape[-2]
    G = _pick_head_group(H, D)
    NG = (B * H) // G

    # Lane-dense merged-head output (B, S, E): no merge-heads transpose needed.
    attn = causal_flash_attention_pallas(
        query.reshape(NG, G, S, D),
        key.reshape(NG, G, T, D),
        value.reshape(NG, G, T, D),
        num_heads=H, out_dtype=compute_dtype)

    # c_proj
    out = conv1d_pallas(attn.reshape(B * S, E),
                        prepared["c_proj_w"], prepared["c_proj_b"],
                        out_dtype=out_dtype)
    return out.reshape(B, S, E), cache_kv


# ----------------------------------------------------------------------------
# Pure-JAX f32 reference (for sanity check; supports layer_past)
# ----------------------------------------------------------------------------
def reference_forward(params, config, hidden_states, layer_past=None):
    B, S, E = hidden_states.shape
    H = config["num_attention_heads"]
    D = E // H
    qkv = hidden_states.reshape(B * S, E) @ params["c_attn_w"] + params["c_attn_b"]
    q, k, v = jnp.split(qkv.reshape(B, S, 3 * E), 3, axis=2)

    def split(t):
        return t.reshape(B, S, H, D).transpose(0, 2, 1, 3)

    q, k, v = split(q), split(k), split(v)
    if layer_past is not None:
        pk, pv = layer_past
        k = jnp.concatenate([pk, k], axis=-2)
        v = jnp.concatenate([pv, v], axis=-2)

    divisor = 1.0
    if config["scale_attn_weights"]:
        divisor *= float(D) ** 0.5
    if config["scale_attn_by_inverse_layer_idx"]:
        divisor *= float(config["layer_idx"] + 1)

    T = k.shape[-2]
    s = jnp.einsum("bhqd,bhkd->bhqk", q, k) / divisor
    row = jnp.arange(S)[:, None]
    col = jnp.arange(T)[None, :]
    mask = col <= row + (T - S)
    s = jnp.where(mask, s, jnp.finfo(s.dtype).min)
    p = jax.nn.softmax(s, axis=-1)
    o = jnp.einsum("bhqk,bhkd->bhqd", p, v)
    o = o.transpose(0, 2, 1, 3).reshape(B, S, E)
    out = (o.reshape(B * S, E) @ params["c_proj_w"] + params["c_proj_b"]).reshape(B, S, E)
    return out, (k, v)


if __name__ == "__main__":
    # Small GPT-2-like config: hidden=32, heads=4 -> head_dim=8, seq=8, batch=2
    config = dict(
        hidden_size=32,
        num_attention_heads=4,
        max_position_embeddings=16,
        scale_attn_weights=True,
        scale_attn_by_inverse_layer_idx=False,
        layer_idx=0,
    )
    B, S, E = 2, 8, config["hidden_size"]
    H = config["num_attention_heads"]
    D = E // H

    key = jax.random.PRNGKey(0)
    k0, k1, k2, k3 = jax.random.split(key, 4)
    params = {
        "c_attn_w": 0.02 * jax.random.normal(k0, (E, 3 * E), jnp.float32),
        "c_attn_b": jnp.zeros((3 * E,), jnp.float32),
        "c_proj_w": 0.02 * jax.random.normal(k1, (E, E), jnp.float32),
        "c_proj_b": jnp.zeros((E,), jnp.float32),
    }
    prepared = prepare_params(params, config)   # scale folded, cast to bf16 once
    hidden_states = jax.random.normal(k2, (B, S, E), jnp.float32)

    # --- prefill ---
    out, (cache_k, cache_v) = gpt2_attention_forward(prepared, config, hidden_states)
    jax.block_until_ready(out)
    jax.block_until_ready(cache_k)
    jax.block_until_ready(cache_v)

    ref_out, (ref_k, ref_v) = reference_forward(params, config, hidden_states)
    assert out.shape == (B, S, E)
    assert cache_k.shape == (B, H, S, D)
    assert cache_v.shape == (B, H, S, D)
    # bf16 compute path vs f32 reference -> loose tolerance
    assert jnp.allclose(out, ref_out, atol=2e-2, rtol=2e-2), "prefill mismatch"
    assert jnp.allclose(cache_k.astype(jnp.float32), ref_k, atol=2e-2, rtol=2e-2), \
        "cache K mismatch"

    # --- decode step with KV cache (T > S path, causal offset exercised) ---
    S_new = 2
    hidden_new = jax.random.normal(k3, (B, S_new, E), jnp.float32)
    out2, (cache_k2, cache_v2) = gpt2_attention_forward(
        prepared, config, hidden_new, layer_past=(cache_k, cache_v))
    jax.block_until_ready(out2)

    ref_out2, (ref_k2, _) = reference_forward(
        params, config, hidden_new, layer_past=(ref_k, ref_v))
    assert out2.shape == (B, S_new, E)
    assert cache_k2.shape == (B, H, S + S_new, D)
    assert jnp.allclose(out2, ref_out2, atol=2e-2, rtol=2e-2), "decode mismatch"

    print("KERNEL_OK")
</pallas_src>

<mosaic_0001>
module attributes {stable_mosaic.version = 11 : i64} {
  func.func @_linear_kernel(%arg0: i32, %arg1: i32, %arg2: i32, %arg3: memref<16x32xbf16, #tpu.memory_space<vmem>>, %arg4: memref<32x96xbf16, #tpu.memory_space<vmem>>, %arg5: memref<1x96xbf16, #tpu.memory_space<vmem>>, %arg6: memref<16x96xbf16, #tpu.memory_space<vmem>>, %arg7: memref<16x96xf32, #tpu.memory_space<vmem>>) attributes {dimension_semantics = [#tpu.dimension_semantics<parallel>, #tpu.dimension_semantics<parallel>, #tpu.dimension_semantics<arbitrary>], iteration_bounds = array<i64: 1, 1, 1>, scalar_prefetch = 0 : i64, scratch_operands = 1 : i64, tpu.core_type = #tpu.core_type<tc>, window_params = [{transform_indices = @transform_0, window_bounds = array<i64: 16, 32>}, {transform_indices = @transform_1, window_bounds = array<i64: 32, 96>}, {transform_indices = @transform_2, window_bounds = array<i64: 1, 96>}, {transform_indices = @transform_3, window_bounds = array<i64: 16, 96>}]} {
    %c0_i32 = arith.constant 0 : i32
    %0 = arith.cmpi eq, %arg2, %c0_i32 : i32
    %1 = arith.extui %0 : i1 to i32
    %c0_i32_0 = arith.constant 0 : i32
    %2 = arith.cmpi ne, %1, %c0_i32_0 : i32
    scf.if %2 {
      %cst_10 = arith.constant 0.000000e+00 : f32
      %12 = vector.broadcast %cst_10 : f32 to vector<16x96xf32>
      %c0_11 = arith.constant 0 : index
      %c0_12 = arith.constant 0 : index
      %13 = vector.load %arg7[%c0_11, %c0_12] : memref<16x96xf32, #tpu.memory_space<vmem>>, vector<16x96xf32>
      tpu.vector_store %arg7[%c0_11, %c0_12], %12 {strides = array<i32>} : memref<16x96xf32, #tpu.memory_space<vmem>>, vector<16x96xf32>,
    } else {
    }
    %c0 = arith.constant 0 : index
    %c0_1 = arith.constant 0 : index
    %3 = vector.load %arg7[%c0, %c0_1] : memref<16x96xf32, #tpu.memory_space<vmem>>, vector<16x96xf32>
    %c0_2 = arith.constant 0 : index
    %c0_3 = arith.constant 0 : index
    %4 = vector.load %arg3[%c0_2, %c0_3] : memref<16x32xbf16, #tpu.memory_space<vmem>>, vector<16x32xbf16>
    %c0_4 = arith.constant 0 : index
    %c0_5 = arith.constant 0 : index
    %5 = vector.load %arg4[%c0_4, %c0_5] : memref<32x96xbf16, #tpu.memory_space<vmem>>, vector<32x96xbf16>
    %cst = arith.constant dense<0.000000e+00> : vector<16x96xf32>
    %6 = tpu.matmul %4, %5, %cst {dimension_numbers = #tpu.dot_dimension_numbers<[1], [0], [0], [1], [0, 0, 1, 1], [], []>} : vector<16x32xbf16>, vector<32x96xbf16>, vector<16x96xf32> -> vector<16x96xf32>
    %7 = arith.addf %3, %6 : vector<16x96xf32>
    %c0_6 = arith.constant 0 : index
    %c0_7 = arith.constant 0 : index
    %8 = vector.load %arg7[%c0_6, %c0_7] : memref<16x96xf32, #tpu.memory_space<vmem>>, vector<16x96xf32>
    tpu.vector_store %arg7[%c0_6, %c0_7], %7 {strides = array<i32>} : memref<16x96xf32, #tpu.memory_space<vmem>>, vector<16x96xf32>,
    %c0_i32_8 = arith.constant 0 : i32
    %9 = arith.cmpi eq, %arg2, %c0_i32_8 : i32
    %10 = arith.extui %9 : i1 to i32
    %c0_i32_9 = arith.constant 0 : i32
    %11 = arith.cmpi ne, %10, %c0_i32_9 : i32
    scf.if %11 {
      %c0_10 = arith.constant 0 : index
      %c0_11 = arith.constant 0 : index
      %12 = vector.load %arg7[%c0_10, %c0_11] : memref<16x96xf32, #tpu.memory_space<vmem>>, vector<16x96xf32>
      %c0_12 = arith.constant 0 : index
      %c0_13 = arith.constant 0 : index
      %13 = vector.load %arg5[%c0_12, %c0_13] : memref<1x96xbf16, #tpu.memory_space<vmem>>, vector<1x96xbf16>
      %14 = arith.extf %13 : vector<1x96xbf16> to vector<1x96xf32>
      %15 = vector.broadcast %14 : vector<1x96xf32> to vector<16x96xf32>
      %16 = arith.addf %12, %15 : vector<16x96xf32>
      %17 = arith.truncf %16 : vector<16x96xf32> to vector<16x96xbf16>
      %c0_14 = arith.constant 0 : index
      %c0_15 = arith.constant 0 : index
      %18 = vector.load %arg6[%c0_14, %c0_15] : memref<16x96xbf16, #tpu.memory_space<vmem>>, vector<16x96xbf16>
      tpu.vector_store %arg6[%c0_14, %c0_15], %17 {strides = array<i32>} : memref<16x96xbf16, #tpu.memory_space<vmem>>, vector<16x96xbf16>,
    } else {
    }
    return
  }
  func.func @transform_0(%arg0: i32, %arg1: i32, %arg2: i32) -> (i32, i32) {
    %c0_i32 = arith.constant 0 : i32
    return %arg0, %arg2 : i32, i32
  }
  func.func @transform_1(%arg0: i32, %arg1: i32, %arg2: i32) -> (i32, i32) {
    %c0_i32 = arith.constant 0 : i32
    return %arg2, %arg1 : i32, i32
  }
  func.func @transform_2(%arg0: i32, %arg1: i32, %arg2: i32) -> (i32, i32) {
    %c0_i32 = arith.constant 0 : i32
    %c0_i32_0 = arith.constant 0 : i32
    return %c0_i32, %arg1 : i32, i32
  }
  func.func @transform_3(%arg0: i32, %arg1: i32, %arg2: i32) -> (i32, i32) {
    %c0_i32 = arith.constant 0 : i32
    return %arg0, %arg1 : i32, i32
  }
}

</mosaic_0001>

<llo_original>
// kernel: tpu_custom_call.1
$region0: #{tpu_custom_call.1}
  #allocation0 [shape = 'u32[]', space=smem, size = 0x4, offset = 0x4, fixed_abs, tag = 'smem constant byte address 0x4 - core index']
  #allocation1 [shape = 'u32[144,128]{1,0:T(1,128)}', space=vmem, size = 0x12000, scoped, tag = 'internal scratch']
  #allocation2 [shape = 'f32[16,96]{1,0:T(8,128)}', space=vmem, size = 0x2000, scoped, tag = 'scratch operand']
  %s0 = inlined_call_operand.hbm [shape: bf16[16,32], index: 0, kind: input, shape index: {}]
  %s1 = inlined_call_operand.hbm [shape: bf16[32,96], index: 1, kind: input, shape index: {}]
  %s2 = inlined_call_operand.vmem [shape: bf16[1,96], index: 2, kind: input, shape index: {}]
  %s3 = inlined_call_operand.hbm [shape: bf16[16,96], index: 3, kind: output, shape index: {}]
  %s4 = sld [smem:[#allocation0]]
  $region38: #{tpu_custom_call.1} parent=0
    _
  %s6 = ssub.s32 1, %s4
  %s7 = scalar_select 0, %s6, %s4
  $region1: #{tpu_custom_call.1} parent=0
    #allocation3 [shape = 'u8[4096]{0}', space=vmem, size = 0x1000, scoped, tag = 'input window, operand 0, single buffered']
    #allocation4 [shape = 's32[1]{0}', space=sflag, size = 0x4, scoped, tag = 'scoped memory for tpu_custom_call.1']
    #allocation5 [shape = 's32[1]{0}', space=sflag, size = 0x4, scoped, tag = 'scoped memory for tpu_custom_call.1']
    #allocation6 [shape = 'u8[8192]{0}', space=vmem, size = 0x2000, scoped, tag = 'input window, operand 1, single buffered']
    #allocation7 [shape = 's32[1]{0}', space=sflag, size = 0x4, scoped, tag = 'scoped memory for tpu_custom_call.1']
    #allocation8 [shape = 'u8[4096]{0}', space=vmem, size = 0x1000, scoped, tag = 'output window, operand 0, single buffered']
    %8 = vsyncpa [#allocation4], 0
    %9 = vsyncpa [#allocation7], 0
    %10 = vsyncpa [#allocation5], 0
    // Predicated region
    $region2: #{tpu_custom_call.1} parent=1 // pred_check
      _
    $region3: #{tpu_custom_call.1} parent=1 // pred_check_branch
      %12 = sbr.rel (0) target = $region5
    $region4: #{tpu_custom_call.1} parent=1 // pred_region
      %s14 = ssub.s32 128, 128
      %15 = vsyncadd [#allocation4], %s14
      %s16 = sshll.u32 [#allocation3], 4
      %s17 = int_to_ptr.vmem [resolvable:$true] %s16
      %22 = dma.hbm_to_vmem [thread:$0]  %s0, 128, %s17, [#allocation4], 64, 64, 4
    $region5: #{tpu_custom_call.1} parent=1 // pred_fallthru
      _
    // Predicated region
    $region6: #{tpu_custom_call.1} parent=1 // pred_check
      _
    $region7: #{tpu_custom_call.1} parent=1 // pred_check_branch
      %24 = sbr.rel (0) target = $region9
    $region8: #{tpu_custom_call.1} parent=1 // pred_region
      %s26 = ssub.s32 256, 256
      %27 = vsyncadd [#allocation7], %s26
      %s28 = sshll.u32 [#allocation6], 4
      %s29 = int_to_ptr.vmem [resolvable:$true] %s28
      %34 = dma.hbm_to_vmem [thread:$0]  %s1, 256, %s29, [#allocation7], 64, 64, 4
    $region9: #{tpu_custom_call.1} parent=1 // pred_fallthru
      _
    // Predicated region
    $region10: #{tpu_custom_call.1} parent=1 // pred_check
      _
    $region11: #{tpu_custom_call.1} parent=1 // pred_check_branch
      %36 = sbr.rel (0) target = $region13
    $region12: #{tpu_custom_call.1} parent=1 // pred_region
      _
    $region13: #{tpu_custom_call.1} parent=1 // pred_fallthru
      _
    // Predicated region
    $region14: #{tpu_custom_call.1} parent=1 // pred_check
      _
    $region15: #{tpu_custom_call.1} parent=1 // pred_check_branch
      %38 = sbr.rel (0) target = $region17
    $region16: #{tpu_custom_call.1} parent=1 // pred_region
      %39 = dma.done [#allocation4], 128
    $region17: #{tpu_custom_call.1} parent=1 // pred_fallthru
      _
    // Predicated region
    $region18: #{tpu_custom_call.1} parent=1 // pred_check
      _
    $region19: #{tpu_custom_call.1} parent=1 // pred_check_branch
      %41 = sbr.rel (0) target = $region21
    $region20: #{tpu_custom_call.1} parent=1 // pred_region
      %42 = dma.done [#allocation7], 256
    $region21: #{tpu_custom_call.1} parent=1 // pred_fallthru
      _
    %p44 = scmp.eq.s32.totalorder 0, 0
    // Predicated region
    $region22: #{tpu_custom_call.1} parent=1 // pred_check
      %p45 = pneg %p44
    $region23: #{tpu_custom_call.1} parent=1 // pred_check_branch
      %47 = sbr.rel (%p45) target = $region25
    $region24: #{tpu_custom_call.1} parent=1 // pred_region
      %vm48 = vcmask 785408
      %49 = vst.msk [vmem:[#allocation2] sm:$0xff] %vm48, 0.0
      %50 = vst.msk [vmem:[#allocation2 + $0x8] sm:$0xff] %vm48, 0.0
    $region25: #{tpu_custom_call.1} parent=1 // pred_fallthru
      _
    %v51 = vld [vmem:[#allocation2] sm:$0xff]
    %v52 = vld [vmem:[#allocation2 + $0x8] sm:$0xff]
    %v53 = vld [vmem:[#allocation3] sm:$0xf]
    %v54 = vld [vmem:[#allocation3 + $0x4] sm:$0xf]
    %v55 = vld [vmem:[#allocation6] sm:$0xf]
    %v56 = vld [vmem:[#allocation6 + $0x4] sm:$0xf]
    %v57 = vld [vmem:[#allocation6 + $0x8] sm:$0xf]
    %v58 = vld [vmem:[#allocation6 + $0xc] sm:$0xf]
    %v61 = vunpack.c.l.b16 %v53
    %v62 = vunpack.c.l.b16 %v54
    %v63 = vpack.c.b16 %v62, %v61
    %v68 = vunpack.c.l.b16 %v55
    %v69 = vunpack.c.l.b16 %v56
    %v70 = vunpack.c.l.b16 %v57
    %v71 = vunpack.c.l.b16 %v58
    %v72 = vpack.c.b16 %v69, %v68
    %v73 = vpack.c.b16 %v71, %v70
    %vm76 = vcmask 261120
    %v78 = vsel %vm76, %v63, 0
    %80 = vmatprep.subr.bf16.mxu0 0
    %81 = vmatpush1.bf16.msra.mxu0 %v72
    %82 = vmatprep.subr.bf16.mxu0 0
    %83 = vmatpush1.bf16.msra.mxu0 %v73
    %84 = vmatprep.subr.bf16.mxu0 0
    %85 = vmatpush1.bf16.msra.mxu0 0
    %86 = vmatprep.subr.bf16.mxu0 0
    %87 = vmatpush1.bf16.msra.mxu0 0
    %88 = vmatprep.subr.bf16.mxu0 0
    %89 = vmatpush1.bf16.msra.mxu0 0
    %90 = vmatprep.subr.bf16.mxu0 0
    %91 = vmatpush1.bf16.msra.mxu0 0
    %92 = vmatprep.subr.bf16.mxu0 0
    %93 = vmatpush1.bf16.msra.mxu0 0
    %94 = vmatprep.subr.bf16.mxu0 0
    %95 = vmatpush1.bf16.msra.mxu0 0
    %96 = vmatprep.subr.bf16.mxu0 0
    %97 = vmatpush1.bf16.msra.mxu0 0
    %98 = vmatprep.subr.bf16.mxu0 0
    %99 = vmatpush1.bf16.msra.mxu0 0
    %100 = vmatprep.subr.bf16.mxu0 0
    %101 = vmatpush1.bf16.msra.mxu0 0
    %102 = vmatprep.subr.bf16.mxu0 0
    %103 = vmatpush1.bf16.msra.mxu0 0
    %104 = vmatprep.subr.bf16.mxu0 0
    %105 = vmatpush1.bf16.msra.mxu0 0
    %106 = vmatprep.subr.bf16.mxu0 0
    %107 = vmatpush1.bf16.msra.mxu0 0
    %108 = vmatprep.subr.bf16.mxu0 0
    %109 = vmatpush1.bf16.msra.mxu0 0
    %110 = vmatprep.subr.bf16.mxu0 0
    %111 = vmatpush1.bf16.msra.mxu0 0
    %112 = vmatprep.mubr.bf16.mxu0 0
    %113 = vmatmul.mubr.bf16.gmra.mrb[0].mxu0 %v78
    %v114 = vpop.f32.mrb[0].mxu0
    %v115 = vadd.f32 0.0, %v114
    %v116 = vpop.f32.mrb[0].mxu0
    %v117 = vpop.f32.mrb[0].mxu0
    %v118 = vadd.f32 0.0, %v117
    %v119 = vpop.f32.mrb[0].mxu0
    %120 = vdwg.mxu0
    %v121 = vadd.f32 %v51, %v115
    %v122 = vadd.f32 %v52, %v118
    %vm123 = vcmask 785408
    %124 = vst.msk [vmem:[#allocation2] sm:$0xff] %vm123, %v121
    %125 = vst.msk [vmem:[#allocation2 + $0x8] sm:$0xff] %vm123, %v122
    // Predicated region
    $region26: #{tpu_custom_call.1} parent=1 // pred_check
      %p126 = pneg %p44
    $region27: #{tpu_custom_call.1} parent=1 // pred_check_branch
      %128 = sbr.rel (%p126) target = $region29
    $region28: #{tpu_custom_call.1} parent=1 // pred_region
      %v129 = vld [vmem:[#allocation2] sm:$0xff]
      %v130 = vld [vmem:[#allocation2 + $0x8] sm:$0xff]
      %v131 = vld [vmem:[%s2] sm:$0x1]
      %v132 = vunpack.c.l.bf16 %v131
      %v133 = vlaneseq
      %v134 = vshrl.u32 %v133, 7
      %v135 = vsub.s32 0, %v134
      %v136 = vrot.slane %v132, %v135
      %v137 = vadd.f32 %v129, %v136
      %v138 = vadd.f32 %v130, %v136
      %v139 = vpack.c.bf16 %v138, %v137
      %v141 = vunpack.c.l.b16 %v139
      %v142 = vunpack.c.h.b16 %v139
      %v143 = vpack.c.b16 %v141, %v141
      %v144 = vpack.c.b16 %v142, %v142
      %vm147 = vcmask 781312
      %148 = vst.msk [vmem:[#allocation8] sm:$0xf] %vm147, %v143
      %149 = vst.msk [vmem:[#allocation8 + $0x4] sm:$0xf] %vm147, %v144
    $region29: #{tpu_custom_call.1} parent=1 // pred_fallthru
      _
    // Predicated region
    $region30: #{tpu_custom_call.1} parent=1 // pred_check
      _
    $region31: #{tpu_custom_call.1} parent=1 // pred_check_branch
      %151 = sbr.rel (0) target = $region33
    $region32: #{tpu_custom_call.1} parent=1 // pred_region
      %s153 = ssub.s32 128, 128
      %154 = vsyncadd [#allocation5], %s153
      %s155 = sshll.u32 [#allocation8], 4
      %s156 = int_to_ptr.vmem [resolvable:$true] %s155
      %161 = dma.vmem_to_hbm [thread:$0]  %s156, 128, %s3, [#allocation5], 64, 64, 4
    $region33: #{tpu_custom_call.1} parent=1 // pred_fallthru
      _
    // Predicated region
    $region34: #{tpu_custom_call.1} parent=1 // pred_check
      _
    $region35: #{tpu_custom_call.1} parent=1 // pred_check_branch
      %163 = sbr.rel (0) target = $region37
    $region36: #{tpu_custom_call.1} parent=1 // pred_region
      %164 = dma.done [#allocation5], 128
    $region37: #{tpu_custom_call.1} parent=1 // pred_fallthru
      _
    %165 = vsyncpa [#allocation4], 1
    %166 = vsyncpa [#allocation7], 1
    %167 = vsyncpa [#allocation5], 1

</llo_original>
